<compile_context>
chip_gen: v7x
topology: tpu7x:2x2x1
jax: 0.10.0
libtpu: 0.0.40
codegen_flags: <defaults>
</compile_context>

<pallas_src>
import jax
import jax.numpy as jnp
from jax.experimental import pallas as pl
from jax.experimental.pallas import tpu as pltpu

K_IN = 28 * 28            # 784 (= 98 * 8, sublane-aligned; lanes handled by Mosaic)
H1 = 128
H2 = 64
N_OUT = 10
TB_MAX = 2048             # batch-tile cap: ~2x6.3 MiB (x) + out + weights << 48 MiB
VMEM_LIMIT = 48 << 20     # v5e's 16 MiB default scoped VMEM can't hold TB=2048


def _round_up(x, m):
    return (x + m - 1) // m * m


def _mlp_kernel(x_ref, w1_ref, b1_ref, w2_ref, b2_ref, w3_ref, b3_ref, o_ref):
    # Whole MLP hot path in one kernel: 3 matmuls + bias adds + 2 ReLUs.
    # Intermediates (TB,128)/(TB,64) never touch HBM; the kernel is purely
    # HBM-bound on the x read, so no compute-side micro-optimization needed.
    x = x_ref[...]
    h1 = jnp.dot(x, w1_ref[...], preferred_element_type=jnp.float32) + b1_ref[...]
    h1 = jnp.maximum(h1, 0.0)
    h2 = jnp.dot(h1, w2_ref[...], preferred_element_type=jnp.float32) + b2_ref[...]
    h2 = jnp.maximum(h2, 0.0)
    out = jnp.dot(h2, w3_ref[...], preferred_element_type=jnp.float32) + b3_ref[...]
    o_ref[...] = out.astype(o_ref.dtype)


@jax.jit
def simple_nn_forward(x, params):
    """x: (B, 28, 28) or (B, 784) float32. Returns (B, 10) logits."""
    w1, b1, w2, b2, w3, b3 = params
    x2d = x.reshape(-1, K_IN)  # same as x.view(-1, 28*28); free (contiguous)
    B = x2d.shape[0]

    # Batch tile: multiple of 8 (sublane); aim for >= 2 grid steps whenever
    # B > 8 so dimension_semantics=("parallel",) can shard the batch across
    # v7x's two TensorCores; cap at TB_MAX to stay inside VMEM.  No batch
    # padding: the final block is ragged (OOB reads are row-local and never
    # mix into kept rows, OOB writes are masked by Pallas).
    TB = max(8, min(TB_MAX, _round_up(pl.cdiv(B, 2), 8)))
    grid = (pl.cdiv(B, TB),)

    # Advisory cost hint for XLA scheduling around the custom call.
    flops = 2 * B * (K_IN * H1 + H1 * H2 + H2 * N_OUT)
    bytes_accessed = 4 * (
        B * K_IN + B * N_OUT
        + K_IN * H1 + H1 * H2 + H2 * N_OUT
        + H1 + H2 + N_OUT
    )
    cost = pl.CostEstimate(flops=flops, transcendentals=0,
                           bytes_accessed=bytes_accessed)

    # Batch-tiled x/out (pipelined / double-buffered); weights and biases use a
    # constant index_map so they are fetched once and stay resident in VMEM
    # across grid steps (no re-DMA of unchanged blocks).
    x_spec = pl.BlockSpec((TB, K_IN), lambda i: (i, 0))
    out_spec = pl.BlockSpec((TB, N_OUT), lambda i: (i, 0))
    const = lambda shape: pl.BlockSpec(shape, lambda i: (0, 0))

    out = pl.pallas_call(
        _mlp_kernel,
        out_shape=jax.ShapeDtypeStruct((B, N_OUT), jnp.float32),
        grid=grid,
        in_specs=[
            x_spec,
            const((K_IN, H1)), const((1, H1)),
            const((H1, H2)), const((1, H2)),
            const((H2, N_OUT)), const((1, N_OUT)),
        ],
        out_specs=out_spec,
        compiler_params=pltpu.CompilerParams(
            dimension_semantics=("parallel",),   # batch axis -> both TCs on v7x
            vmem_limit_bytes=VMEM_LIMIT,
        ),
        cost_estimate=cost,
    )(x2d, w1, b1, w2, b2, w3, b3)

    return out


def init_params(key):
    """Deterministic init mimicking nn.Linear's U(-1/sqrt(fan_in), 1/sqrt(fan_in))."""
    def linear(key, fan_in, fan_out):
        kw, kb = jax.random.split(key)
        bound = 1.0 / jnp.sqrt(fan_in)
        # stored as (in, out) so kernel does x @ W
        w = jax.random.uniform(kw, (fan_in, fan_out), jnp.float32, -bound, bound)
        b = jax.random.uniform(kb, (1, fan_out), jnp.float32, -bound, bound)
        return w, b

    k1, k2, k3 = jax.random.split(key, 3)
    w1, b1 = linear(k1, K_IN, H1)
    w2, b2 = linear(k2, H1, H2)
    w3, b3 = linear(k3, H2, N_OUT)
    return (w1, b1, w2, b2, w3, b3)


def _reference(x, params):
    w1, b1, w2, b2, w3, b3 = params
    h = x.reshape(-1, K_IN)
    h = jnp.maximum(h @ w1 + b1, 0.0)
    h = jnp.maximum(h @ w2 + b2, 0.0)
    return h @ w3 + b3


if __name__ == "__main__":
    key = jax.random.PRNGKey(0)
    kp, kx = jax.random.split(key)
    params = init_params(kp)

    B = 8
    x = jax.random.normal(kx, (B, 28, 28), jnp.float32)  # MNIST-like input

    out = simple_nn_forward(x, params)
    jax.block_until_ready(out)

    ref = _reference(x, params)
    assert out.shape == (B, N_OUT), out.shape
    assert jnp.allclose(out, ref, atol=1e-4, rtol=1e-4), "mismatch vs reference"

    # TODO(synk): bf16 x/weights (with f32 MXU accumulation) would halve HBM
    # read traffic for ~2x throughput at large B, but is kept f32 to preserve
    # exact parity with the PyTorch float32 reference.
    print("KERNEL_OK")
</pallas_src>

<mosaic_0001>
module attributes {stable_mosaic.version = 11 : i64} {
  func.func @_mlp_kernel(%arg0: i32, %arg1: memref<8x784xf32, #tpu.memory_space<vmem>>, %arg2: memref<784x128xf32, #tpu.memory_space<vmem>>, %arg3: memref<1x128xf32, #tpu.memory_space<vmem>>, %arg4: memref<128x64xf32, #tpu.memory_space<vmem>>, %arg5: memref<1x64xf32, #tpu.memory_space<vmem>>, %arg6: memref<64x10xf32, #tpu.memory_space<vmem>>, %arg7: memref<1x10xf32, #tpu.memory_space<vmem>>, %arg8: memref<8x10xf32, #tpu.memory_space<vmem>>) attributes {dimension_semantics = [#tpu.dimension_semantics<parallel>], iteration_bounds = array<i64: 1>, scalar_prefetch = 0 : i64, scratch_operands = 0 : i64, tpu.core_type = #tpu.core_type<tc>, window_params = [{transform_indices = @transform_0, window_bounds = array<i64: 8, 784>}, {pipeline_mode = #tpu.pipeline_mode<synchronous>, transform_indices = @transform_1, window_bounds = array<i64: 784, 128>}, {pipeline_mode = #tpu.pipeline_mode<synchronous>, transform_indices = @transform_2, window_bounds = array<i64: 1, 128>}, {pipeline_mode = #tpu.pipeline_mode<synchronous>, transform_indices = @transform_3, window_bounds = array<i64: 128, 64>}, {pipeline_mode = #tpu.pipeline_mode<synchronous>, transform_indices = @transform_4, window_bounds = array<i64: 1, 64>}, {pipeline_mode = #tpu.pipeline_mode<synchronous>, transform_indices = @transform_5, window_bounds = array<i64: 64, 10>}, {pipeline_mode = #tpu.pipeline_mode<synchronous>, transform_indices = @transform_6, window_bounds = array<i64: 1, 10>}, {transform_indices = @transform_7, window_bounds = array<i64: 8, 10>}]} {
    %c0 = arith.constant 0 : index
    %c0_0 = arith.constant 0 : index
    %0 = vector.load %arg1[%c0, %c0_0] : memref<8x784xf32, #tpu.memory_space<vmem>>, vector<8x784xf32>
    %c0_1 = arith.constant 0 : index
    %c0_2 = arith.constant 0 : index
    %1 = vector.load %arg2[%c0_1, %c0_2] : memref<784x128xf32, #tpu.memory_space<vmem>>, vector<784x128xf32>
    %cst = arith.constant dense<0.000000e+00> : vector<8x128xf32>
    %2 = tpu.matmul %0, %1, %cst {dimension_numbers = #tpu.dot_dimension_numbers<[1], [0], [0], [1], [0, 0, 1, 1], [], []>} : vector<8x784xf32>, vector<784x128xf32>, vector<8x128xf32> -> vector<8x128xf32>
    %c0_3 = arith.constant 0 : index
    %c0_4 = arith.constant 0 : index
    %3 = vector.load %arg3[%c0_3, %c0_4] : memref<1x128xf32, #tpu.memory_space<vmem>>, vector<1x128xf32>
    %4 = vector.broadcast %3 : vector<1x128xf32> to vector<8x128xf32>
    %5 = arith.addf %2, %4 : vector<8x128xf32>
    %cst_5 = arith.constant 0.000000e+00 : f32
    %6 = vector.broadcast %cst_5 : f32 to vector<8x128xf32>
    %7 = arith.maximumf %5, %6 : vector<8x128xf32>
    %c0_6 = arith.constant 0 : index
    %c0_7 = arith.constant 0 : index
    %8 = vector.load %arg4[%c0_6, %c0_7] : memref<128x64xf32, #tpu.memory_space<vmem>>, vector<128x64xf32>
    %cst_8 = arith.constant dense<0.000000e+00> : vector<8x64xf32>
    %9 = tpu.matmul %7, %8, %cst_8 {dimension_numbers = #tpu.dot_dimension_numbers<[1], [0], [0], [1], [0, 0, 1, 1], [], []>} : vector<8x128xf32>, vector<128x64xf32>, vector<8x64xf32> -> vector<8x64xf32>
    %c0_9 = arith.constant 0 : index
    %c0_10 = arith.constant 0 : index
    %10 = vector.load %arg5[%c0_9, %c0_10] : memref<1x64xf32, #tpu.memory_space<vmem>>, vector<1x64xf32>
    %11 = vector.broadcast %10 : vector<1x64xf32> to vector<8x64xf32>
    %12 = arith.addf %9, %11 : vector<8x64xf32>
    %cst_11 = arith.constant 0.000000e+00 : f32
    %13 = vector.broadcast %cst_11 : f32 to vector<8x64xf32>
    %14 = arith.maximumf %12, %13 : vector<8x64xf32>
    %c0_12 = arith.constant 0 : index
    %c0_13 = arith.constant 0 : index
    %15 = vector.load %arg6[%c0_12, %c0_13] : memref<64x10xf32, #tpu.memory_space<vmem>>, vector<64x10xf32>
    %cst_14 = arith.constant dense<0.000000e+00> : vector<8x10xf32>
    %16 = tpu.matmul %14, %15, %cst_14 {dimension_numbers = #tpu.dot_dimension_numbers<[1], [0], [0], [1], [0, 0, 1, 1], [], []>} : vector<8x64xf32>, vector<64x10xf32>, vector<8x10xf32> -> vector<8x10xf32>
    %c0_15 = arith.constant 0 : index
    %c0_16 = arith.constant 0 : index
    %17 = vector.load %arg7[%c0_15, %c0_16] : memref<1x10xf32, #tpu.memory_space<vmem>>, vector<1x10xf32>
    %18 = vector.broadcast %17 : vector<1x10xf32> to vector<8x10xf32>
    %19 = arith.addf %16, %18 : vector<8x10xf32>
    %c0_17 = arith.constant 0 : index
    %c0_18 = arith.constant 0 : index
    %20 = vector.load %arg8[%c0_17, %c0_18] : memref<8x10xf32, #tpu.memory_space<vmem>>, vector<8x10xf32>
    tpu.vector_store %arg8[%c0_17, %c0_18], %19 {strides = array<i32>} : memref<8x10xf32, #tpu.memory_space<vmem>>, vector<8x10xf32>,
    return
  }
  func.func @transform_0(%arg0: i32) -> (i32, i32) {
    %c0_i32 = arith.constant 0 : i32
    %c0_i32_0 = arith.constant 0 : i32
    return %arg0, %c0_i32 : i32, i32
  }
  func.func @transform_1(%arg0: i32) -> (i32, i32) {
    %c0_i32 = arith.constant 0 : i32
    %c0_i32_0 = arith.constant 0 : i32
    %c0_i32_1 = arith.constant 0 : i32
    return %c0_i32, %c0_i32_0 : i32, i32
  }
  func.func @transform_2(%arg0: i32) -> (i32, i32) {
    %c0_i32 = arith.constant 0 : i32
    %c0_i32_0 = arith.constant 0 : i32
    %c0_i32_1 = arith.constant 0 : i32
    return %c0_i32, %c0_i32_0 : i32, i32
  }
  func.func @transform_3(%arg0: i32) -> (i32, i32) {
    %c0_i32 = arith.constant 0 : i32
    %c0_i32_0 = arith.constant 0 : i32
    %c0_i32_1 = arith.constant 0 : i32
    return %c0_i32, %c0_i32_0 : i32, i32
  }
  func.func @transform_4(%arg0: i32) -> (i32, i32) {
    %c0_i32 = arith.constant 0 : i32
    %c0_i32_0 = arith.constant 0 : i32
    %c0_i32_1 = arith.constant 0 : i32
    return %c0_i32, %c0_i32_0 : i32, i32
  }
  func.func @transform_5(%arg0: i32) -> (i32, i32) {
    %c0_i32 = arith.constant 0 : i32
    %c0_i32_0 = arith.constant 0 : i32
    %c0_i32_1 = arith.constant 0 : i32
    return %c0_i32, %c0_i32_0 : i32, i32
  }
  func.func @transform_6(%arg0: i32) -> (i32, i32) {
    %c0_i32 = arith.constant 0 : i32
    %c0_i32_0 = arith.constant 0 : i32
    %c0_i32_1 = arith.constant 0 : i32
    return %c0_i32, %c0_i32_0 : i32, i32
  }
  func.func @transform_7(%arg0: i32) -> (i32, i32) {
    %c0_i32 = arith.constant 0 : i32
    %c0_i32_0 = arith.constant 0 : i32
    return %arg0, %c0_i32 : i32, i32
  }
}

</mosaic_0001>

<llo_original>
// kernel: simple_nn_forward.1
$region0: #{simple_nn_forward.1}
  #allocation0 [shape = 'u32[]', space=smem, size = 0x4, offset = 0x4, fixed_abs, tag = 'smem constant byte address 0x4 - core index']
  #allocation1 [shape = 'u32[144,128]{1,0:T(1,128)}', space=vmem, size = 0x12000, scoped, tag = 'internal scratch']
  %s0 = inlined_call_operand.vmem [shape: f32[8,784], index: 0, kind: input, shape index: {}]
  %s1 = inlined_call_operand.vmem [shape: f32[784,128], index: 1, kind: input, shape index: {}]
  %s2 = inlined_call_operand.vmem [shape: f32[1,128], index: 2, kind: input, shape index: {}]
  %s3 = inlined_call_operand.vmem [shape: f32[128,64], index: 3, kind: input, shape index: {}]
  %s4 = inlined_call_operand.vmem [shape: f32[1,64], index: 4, kind: input, shape index: {}]
  %s5 = inlined_call_operand.vmem [shape: f32[64,10], index: 5, kind: input, shape index: {}]
  %s6 = inlined_call_operand.vmem [shape: f32[1,10], index: 6, kind: input, shape index: {}]
  %s7 = inlined_call_operand.hbm [shape: f32[8,10], index: 7, kind: output, shape index: {}]
  %s8 = sld [smem:[#allocation0]]
  $region38: #{simple_nn_forward.1} parent=0
    _
  %s10 = ssub.s32 1, %s8
  %s11 = scalar_select 0, %s10, %s8
  $region1: #{simple_nn_forward.1} parent=0
    #allocation2 [shape = 'u8[4096]{0}', space=vmem, size = 0x1000, scoped, tag = 'output window, operand 0, single buffered']
    #allocation3 [shape = 's32[1]{0}', space=sflag, size = 0x4, scoped, tag = 'scoped memory for simple_nn_forward.1']
    %12 = vsyncpa [#allocation3], 0
    // Predicated region
    $region2: #{simple_nn_forward.1} parent=1 // pred_check
      _
    $region3: #{simple_nn_forward.1} parent=1 // pred_check_branch
      %14 = sbr.rel (0) target = $region5
    $region4: #{simple_nn_forward.1} parent=1 // pred_region
      _
    $region5: #{simple_nn_forward.1} parent=1 // pred_fallthru
      _
    // Predicated region
    $region6: #{simple_nn_forward.1} parent=1 // pred_check
      _
    $region7: #{simple_nn_forward.1} parent=1 // pred_check_branch
      %16 = sbr.rel (0) target = $region9
    $region8: #{simple_nn_forward.1} parent=1 // pred_region
      _
    $region9: #{simple_nn_forward.1} parent=1 // pred_fallthru
      _
    // Predicated region
    $region10: #{simple_nn_forward.1} parent=1 // pred_check
      _
    $region11: #{simple_nn_forward.1} parent=1 // pred_check_branch
      %18 = sbr.rel (0) target = $region13
    $region12: #{simple_nn_forward.1} parent=1 // pred_region
      _
    $region13: #{simple_nn_forward.1} parent=1 // pred_fallthru
      _
    // Predicated region
    $region14: #{simple_nn_forward.1} parent=1 // pred_check
      _
    $region15: #{simple_nn_forward.1} parent=1 // pred_check_branch
      %20 = sbr.rel (0) target = $region17
    $region16: #{simple_nn_forward.1} parent=1 // pred_region
      _
    $region17: #{simple_nn_forward.1} parent=1 // pred_fallthru
      _
    // Predicated region
    $region18: #{simple_nn_forward.1} parent=1 // pred_check
      _
    $region19: #{simple_nn_forward.1} parent=1 // pred_check_branch
      %22 = sbr.rel (0) target = $region21
    $region20: #{simple_nn_forward.1} parent=1 // pred_region
      _
    $region21: #{simple_nn_forward.1} parent=1 // pred_fallthru
      _
    // Predicated region
    $region22: #{simple_nn_forward.1} parent=1 // pred_check
      _
    $region23: #{simple_nn_forward.1} parent=1 // pred_check_branch
      %24 = sbr.rel (0) target = $region25
    $region24: #{simple_nn_forward.1} parent=1 // pred_region
      _
    $region25: #{simple_nn_forward.1} parent=1 // pred_fallthru
      _
    // Predicated region
    $region26: #{simple_nn_forward.1} parent=1 // pred_check
      _
    $region27: #{simple_nn_forward.1} parent=1 // pred_check_branch
      %26 = sbr.rel (0) target = $region29
    $region28: #{simple_nn_forward.1} parent=1 // pred_region
      _
    $region29: #{simple_nn_forward.1} parent=1 // pred_fallthru
      _
    %v27 = vld [vmem:[%s0] sm:$0xff]
    %v28 = vld [vmem:[%s0 + $0x8] sm:$0xff]
    %v29 = vld [vmem:[%s0 + $0x10] sm:$0xff]
    %v30 = vld [vmem:[%s0 + $0x18] sm:$0xff]
    %v31 = vld [vmem:[%s0 + $0x20] sm:$0xff]
    %v32 = vld [vmem:[%s0 + $0x28] sm:$0xff]
    %v33 = vld [vmem:[%s0 + $0x30] sm:$0xff]
    %v34 = vld [vmem:[%s1] sm:$0xff]
    %v35 = vld [vmem:[%s1 + $0x8] sm:$0xff]
    %v36 = vld [vmem:[%s1 + $0x10] sm:$0xff]
    %v37 = vld [vmem:[%s1 + $0x18] sm:$0xff]
    %v38 = vld [vmem:[%s1 + $0x20] sm:$0xff]
    %v39 = vld [vmem:[%s1 + $0x28] sm:$0xff]
    %v40 = vld [vmem:[%s1 + $0x30] sm:$0xff]
    %v41 = vld [vmem:[%s1 + $0x38] sm:$0xff]
    %v42 = vld [vmem:[%s1 + $0x40] sm:$0xff]
    %v43 = vld [vmem:[%s1 + $0x48] sm:$0xff]
    %v44 = vld [vmem:[%s1 + $0x50] sm:$0xff]
    %v45 = vld [vmem:[%s1 + $0x58] sm:$0xff]
    %v46 = vld [vmem:[%s1 + $0x60] sm:$0xff]
    %v47 = vld [vmem:[%s1 + $0x68] sm:$0xff]
    %v48 = vld [vmem:[%s1 + $0x70] sm:$0xff]
    %v49 = vld [vmem:[%s1 + $0x78] sm:$0xff]
    %v50 = vld [vmem:[%s1 + $0x80] sm:$0xff]
    %v51 = vld [vmem:[%s1 + $0x88] sm:$0xff]
    %v52 = vld [vmem:[%s1 + $0x90] sm:$0xff]
    %v53 = vld [vmem:[%s1 + $0x98] sm:$0xff]
    %v54 = vld [vmem:[%s1 + $0xa0] sm:$0xff]
    %v55 = vld [vmem:[%s1 + $0xa8] sm:$0xff]
    %v56 = vld [vmem:[%s1 + $0xb0] sm:$0xff]
    %v57 = vld [vmem:[%s1 + $0xb8] sm:$0xff]
    %v58 = vld [vmem:[%s1 + $0xc0] sm:$0xff]
    %v59 = vld [vmem:[%s1 + $0xc8] sm:$0xff]
    %v60 = vld [vmem:[%s1 + $0xd0] sm:$0xff]
    %v61 = vld [vmem:[%s1 + $0xd8] sm:$0xff]
    %v62 = vld [vmem:[%s1 + $0xe0] sm:$0xff]
    %v63 = vld [vmem:[%s1 + $0xe8] sm:$0xff]
    %v64 = vld [vmem:[%s1 + $0xf0] sm:$0xff]
    %v65 = vld [vmem:[%s1 + $0xf8] sm:$0xff]
    %v66 = vld [vmem:[%s1 + $0x100] sm:$0xff]
    %v67 = vld [vmem:[%s1 + $0x108] sm:$0xff]
    %v68 = vld [vmem:[%s1 + $0x110] sm:$0xff]
    %v69 = vld [vmem:[%s1 + $0x118] sm:$0xff]
    %v70 = vld [vmem:[%s1 + $0x120] sm:$0xff]
    %v71 = vld [vmem:[%s1 + $0x128] sm:$0xff]
    %v72 = vld [vmem:[%s1 + $0x130] sm:$0xff]
    %v73 = vld [vmem:[%s1 + $0x138] sm:$0xff]
    %v74 = vld [vmem:[%s1 + $0x140] sm:$0xff]
    %v75 = vld [vmem:[%s1 + $0x148] sm:$0xff]
    %v76 = vld [vmem:[%s1 + $0x150] sm:$0xff]
    %v77 = vld [vmem:[%s1 + $0x158] sm:$0xff]
    %v78 = vld [vmem:[%s1 + $0x160] sm:$0xff]
    %v79 = vld [vmem:[%s1 + $0x168] sm:$0xff]
    %v80 = vld [vmem:[%s1 + $0x170] sm:$0xff]
    %v81 = vld [vmem:[%s1 + $0x178] sm:$0xff]
    %v82 = vld [vmem:[%s1 + $0x180] sm:$0xff]
    %v83 = vld [vmem:[%s1 + $0x188] sm:$0xff]
    %v84 = vld [vmem:[%s1 + $0x190] sm:$0xff]
    %v85 = vld [vmem:[%s1 + $0x198] sm:$0xff]
    %v86 = vld [vmem:[%s1 + $0x1a0] sm:$0xff]
    %v87 = vld [vmem:[%s1 + $0x1a8] sm:$0xff]
    %v88 = vld [vmem:[%s1 + $0x1b0] sm:$0xff]
    %v89 = vld [vmem:[%s1 + $0x1b8] sm:$0xff]
    %v90 = vld [vmem:[%s1 + $0x1c0] sm:$0xff]
    %v91 = vld [vmem:[%s1 + $0x1c8] sm:$0xff]
    %v92 = vld [vmem:[%s1 + $0x1d0] sm:$0xff]
    %v93 = vld [vmem:[%s1 + $0x1d8] sm:$0xff]
    %v94 = vld [vmem:[%s1 + $0x1e0] sm:$0xff]
    %v95 = vld [vmem:[%s1 + $0x1e8] sm:$0xff]
    %v96 = vld [vmem:[%s1 + $0x1f0] sm:$0xff]
    %v97 = vld [vmem:[%s1 + $0x1f8] sm:$0xff]
    %v98 = vld [vmem:[%s1 + $0x200] sm:$0xff]
    %v99 = vld [vmem:[%s1 + $0x208] sm:$0xff]
    %v100 = vld [vmem:[%s1 + $0x210] sm:$0xff]
    %v101 = vld [vmem:[%s1 + $0x218] sm:$0xff]
    %v102 = vld [vmem:[%s1 + $0x220] sm:$0xff]
    %v103 = vld [vmem:[%s1 + $0x228] sm:$0xff]
    %v104 = vld [vmem:[%s1 + $0x230] sm:$0xff]
    %v105 = vld [vmem:[%s1 + $0x238] sm:$0xff]
    %v106 = vld [vmem:[%s1 + $0x240] sm:$0xff]
    %v107 = vld [vmem:[%s1 + $0x248] sm:$0xff]
    %v108 = vld [vmem:[%s1 + $0x250] sm:$0xff]
    %v109 = vld [vmem:[%s1 + $0x258] sm:$0xff]
    %v110 = vld [vmem:[%s1 + $0x260] sm:$0xff]
    %v111 = vld [vmem:[%s1 + $0x268] sm:$0xff]
    %v112 = vld [vmem:[%s1 + $0x270] sm:$0xff]
    %v113 = vld [vmem:[%s1 + $0x278] sm:$0xff]
    %v114 = vld [vmem:[%s1 + $0x280] sm:$0xff]
    %v115 = vld [vmem:[%s1 + $0x288] sm:$0xff]
    %v116 = vld [vmem:[%s1 + $0x290] sm:$0xff]
    %v117 = vld [vmem:[%s1 + $0x298] sm:$0xff]
    %v118 = vld [vmem:[%s1 + $0x2a0] sm:$0xff]
    %v119 = vld [vmem:[%s1 + $0x2a8] sm:$0xff]
    %v120 = vld [vmem:[%s1 + $0x2b0] sm:$0xff]
    %v121 = vld [vmem:[%s1 + $0x2b8] sm:$0xff]
    %v122 = vld [vmem:[%s1 + $0x2c0] sm:$0xff]
    %v123 = vld [vmem:[%s1 + $0x2c8] sm:$0xff]
    %v124 = vld [vmem:[%s1 + $0x2d0] sm:$0xff]
    %v125 = vld [vmem:[%s1 + $0x2d8] sm:$0xff]
    %v126 = vld [vmem:[%s1 + $0x2e0] sm:$0xff]
    %v127 = vld [vmem:[%s1 + $0x2e8] sm:$0xff]
    %v128 = vld [vmem:[%s1 + $0x2f0] sm:$0xff]
    %v129 = vld [vmem:[%s1 + $0x2f8] sm:$0xff]
    %v130 = vld [vmem:[%s1 + $0x300] sm:$0xff]
    %v131 = vld [vmem:[%s1 + $0x308] sm:$0xff]
    %v132 = vld [vmem:[%s2] sm:$0x1]
    %v134 = vlaneseq
    %v135 = vshrl.u32 %v134, 7
    %v136 = vsub.s32 0, %v135
    %v137 = vrot.slane %v132, %v136
    %vm139 = vcmask 130048
    %v141 = vsel %vm139, %v33, 0
    %143 = vmatprep.subr.mxu0 0.0
    %144 = vmatpush1.msra.mxu0 %v34
    %145 = vmatprep.subr.mxu0 0.0
    %146 = vmatpush1.msra.mxu0 %v35
    %147 = vmatprep.subr.mxu0 0.0
    %148 = vmatpush1.msra.mxu0 %v36
    %149 = vmatprep.subr.mxu0 0.0
    %150 = vmatpush1.msra.mxu0 %v37
    %151 = vmatprep.subr.mxu0 0.0
    %152 = vmatpush1.msra.mxu0 %v38
    %153 = vmatprep.subr.mxu0 0.0
    %154 = vmatpush1.msra.mxu0 %v39
    %155 = vmatprep.subr.mxu0 0.0
    %156 = vmatpush1.msra.mxu0 %v40
    %157 = vmatprep.subr.mxu0 0.0
    %158 = vmatpush1.msra.mxu0 %v41
    %159 = vmatprep.subr.mxu0 0.0
    %160 = vmatpush1.msra.mxu0 %v42
    %161 = vmatprep.subr.mxu0 0.0
    %162 = vmatpush1.msra.mxu0 %v43
    %163 = vmatprep.subr.mxu0 0.0
    %164 = vmatpush1.msra.mxu0 %v44
    %165 = vmatprep.subr.mxu0 0.0
    %166 = vmatpush1.msra.mxu0 %v45
    %167 = vmatprep.subr.mxu0 0.0
    %168 = vmatpush1.msra.mxu0 %v46
    %169 = vmatprep.subr.mxu0 0.0
    %170 = vmatpush1.msra.mxu0 %v47
    %171 = vmatprep.subr.mxu0 0.0
    %172 = vmatpush1.msra.mxu0 %v48
    %173 = vmatprep.subr.mxu0 0.0
    %174 = vmatpush1.msra.mxu0 %v49
    %175 = vmatprep.subr.mxu0 0.0
    %176 = vmatpush1.msra.mxu0 %v50
    %177 = vmatprep.subr.mxu0 0.0
    %178 = vmatpush1.msra.mxu0 %v51
    %179 = vmatprep.subr.mxu0 0.0
    %180 = vmatpush1.msra.mxu0 %v52
    %181 = vmatprep.subr.mxu0 0.0
    %182 = vmatpush1.msra.mxu0 %v53
    %183 = vmatprep.subr.mxu0 0.0
    %184 = vmatpush1.msra.mxu0 %v54
    %185 = vmatprep.subr.mxu0 0.0
    %186 = vmatpush1.msra.mxu0 %v55
    %187 = vmatprep.subr.mxu0 0.0
    %188 = vmatpush1.msra.mxu0 %v56
    %189 = vmatprep.subr.mxu0 0.0
    %190 = vmatpush1.msra.mxu0 %v57
    %191 = vmatprep.subr.mxu0 0.0
    %192 = vmatpush1.msra.mxu0 %v58
    %193 = vmatprep.subr.mxu0 0.0
    %194 = vmatpush1.msra.mxu0 %v59
    %195 = vmatprep.subr.mxu0 0.0
    %196 = vmatpush1.msra.mxu0 %v60
    %197 = vmatprep.subr.mxu0 0.0
    %198 = vmatpush1.msra.mxu0 %v61
    %199 = vmatprep.subr.mxu0 0.0
    %200 = vmatpush1.msra.mxu0 %v62
    %201 = vmatprep.subr.mxu0 0.0
    %202 = vmatpush1.msra.mxu0 %v63
    %203 = vmatprep.subr.mxu0 0.0
    %204 = vmatpush1.msra.mxu0 %v64
    %205 = vmatprep.subr.mxu0 0.0
    %206 = vmatpush1.msra.mxu0 %v65
    %207 = vmatprep.mubr.f32.mxu0 %v28
    %208 = vmatmul.mubr.f32.gmra.mrb[0].mxu0 %v27
    %v209 = vpop.f32.mrb[0].mxu0
    %v210 = vadd.f32 %v137, %v209
    %v211 = vpop.f32.mrb[0].mxu0
    %212 = vdwg.mxu0
    %213 = vmatprep.subr.mxu0 0.0
    %214 = vmatpush1.msra.mxu0 %v66
    %215 = vmatprep.subr.mxu0 0.0
    %216 = vmatpush1.msra.mxu0 %v67
    %217 = vmatprep.subr.mxu0 0.0
    %218 = vmatpush1.msra.mxu0 %v68
    %219 = vmatprep.subr.mxu0 0.0
    %220 = vmatpush1.msra.mxu0 %v69
    %221 = vmatprep.subr.mxu0 0.0
    %222 = vmatpush1.msra.mxu0 %v70
    %223 = vmatprep.subr.mxu0 0.0
    %224 = vmatpush1.msra.mxu0 %v71
    %225 = vmatprep.subr.mxu0 0.0
    %226 = vmatpush1.msra.mxu0 %v72
    %227 = vmatprep.subr.mxu0 0.0
    %228 = vmatpush1.msra.mxu0 %v73
    %229 = vmatprep.subr.mxu0 0.0
    %230 = vmatpush1.msra.mxu0 %v74
    %231 = vmatprep.subr.mxu0 0.0
    %232 = vmatpush1.msra.mxu0 %v75
    %233 = vmatprep.subr.mxu0 0.0
    %234 = vmatpush1.msra.mxu0 %v76
    %235 = vmatprep.subr.mxu0 0.0
    %236 = vmatpush1.msra.mxu0 %v77
    %237 = vmatprep.subr.mxu0 0.0
    %238 = vmatpush1.msra.mxu0 %v78
    %239 = vmatprep.subr.mxu0 0.0
    %240 = vmatpush1.msra.mxu0 %v79
    %241 = vmatprep.subr.mxu0 0.0
    %242 = vmatpush1.msra.mxu0 %v80
    %243 = vmatprep.subr.mxu0 0.0
    %244 = vmatpush1.msra.mxu0 %v81
    %245 = vmatprep.subr.mxu0 0.0
    %246 = vmatpush1.msra.mxu0 %v82
    %247 = vmatprep.subr.mxu0 0.0
    %248 = vmatpush1.msra.mxu0 %v83
    %249 = vmatprep.subr.mxu0 0.0
    %250 = vmatpush1.msra.mxu0 %v84
    %251 = vmatprep.subr.mxu0 0.0
    %252 = vmatpush1.msra.mxu0 %v85
    %253 = vmatprep.subr.mxu0 0.0
    %254 = vmatpush1.msra.mxu0 %v86
    %255 = vmatprep.subr.mxu0 0.0
    %256 = vmatpush1.msra.mxu0 %v87
    %257 = vmatprep.subr.mxu0 0.0
    %258 = vmatpush1.msra.mxu0 %v88
    %259 = vmatprep.subr.mxu0 0.0
    %260 = vmatpush1.msra.mxu0 %v89
    %261 = vmatprep.subr.mxu0 0.0
    %262 = vmatpush1.msra.mxu0 %v90
    %263 = vmatprep.subr.mxu0 0.0
    %264 = vmatpush1.msra.mxu0 %v91
    %265 = vmatprep.subr.mxu0 0.0
    %266 = vmatpush1.msra.mxu0 %v92
    %267 = vmatprep.subr.mxu0 0.0
    %268 = vmatpush1.msra.mxu0 %v93
    %269 = vmatprep.subr.mxu0 0.0
    %270 = vmatpush1.msra.mxu0 %v94
    %271 = vmatprep.subr.mxu0 0.0
    %272 = vmatpush1.msra.mxu0 %v95
    %273 = vmatprep.subr.mxu0 0.0
    %274 = vmatpush1.msra.mxu0 %v96
    %275 = vmatprep.subr.mxu0 0.0
    %276 = vmatpush1.msra.mxu0 %v97
    %277 = vmatprep.mubr.f32.mxu0 %v30
    %278 = vmatmul.mubr.f32.gmra.mrb[0].mxu0 %v29
    %v279 = vpop.f32.mrb[0].mxu0
    %v280 = vadd.f32 %v210, %v279
    %v281 = vpop.f32.mrb[0].mxu0
    %282 = vdwg.mxu0
    %283 = vmatprep.subr.mxu0 0.0
    %284 = vmatpush1.msra.mxu0 %v98
    %285 = vmatprep.subr.mxu0 0.0
    %286 = vmatpush1.msra.mxu0 %v99
    %287 = vmatprep.subr.mxu0 0.0
    %288 = vmatpush1.msra.mxu0 %v100
    %289 = vmatprep.subr.mxu0 0.0
    %290 = vmatpush1.msra.mxu0 %v101
    %291 = vmatprep.subr.mxu0 0.0
    %292 = vmatpush1.msra.mxu0 %v102
    %293 = vmatprep.subr.mxu0 0.0
    %294 = vmatpush1.msra.mxu0 %v103
    %295 = vmatprep.subr.mxu0 0.0
    %296 = vmatpush1.msra.mxu0 %v104
    %297 = vmatprep.subr.mxu0 0.0
    %298 = vmatpush1.msra.mxu0 %v105
    %299 = vmatprep.subr.mxu0 0.0
    %300 = vmatpush1.msra.mxu0 %v106
    %301 = vmatprep.subr.mxu0 0.0
    %302 = vmatpush1.msra.mxu0 %v107
    %303 = vmatprep.subr.mxu0 0.0
    %304 = vmatpush1.msra.mxu0 %v108
    %305 = vmatprep.subr.mxu0 0.0
    %306 = vmatpush1.msra.mxu0 %v109
    %307 = vmatprep.subr.mxu0 0.0
    %308 = vmatpush1.msra.mxu0 %v110
    %309 = vmatprep.subr.mxu0 0.0
    %310 = vmatpush1.msra.mxu0 %v111
    %311 = vmatprep.subr.mxu0 0.0
    %312 = vmatpush1.msra.mxu0 %v112
    %313 = vmatprep.subr.mxu0 0.0
    %314 = vmatpush1.msra.mxu0 %v113
    %315 = vmatprep.subr.mxu0 0.0
    %316 = vmatpush1.msra.mxu0 %v114
    %317 = vmatprep.subr.mxu0 0.0
    %318 = vmatpush1.msra.mxu0 %v115
    %319 = vmatprep.subr.mxu0 0.0
    %320 = vmatpush1.msra.mxu0 %v116
    %321 = vmatprep.subr.mxu0 0.0
    %322 = vmatpush1.msra.mxu0 %v117
    %323 = vmatprep.subr.mxu0 0.0
    %324 = vmatpush1.msra.mxu0 %v118
    %325 = vmatprep.subr.mxu0 0.0
    %326 = vmatpush1.msra.mxu0 %v119
    %327 = vmatprep.subr.mxu0 0.0
    %328 = vmatpush1.msra.mxu0 %v120
    %329 = vmatprep.subr.mxu0 0.0
    %330 = vmatpush1.msra.mxu0 %v121
    %331 = vmatprep.subr.mxu0 0.0
    %332 = vmatpush1.msra.mxu0 %v122
    %333 = vmatprep.subr.mxu0 0.0
    %334 = vmatpush1.msra.mxu0 %v123
    %335 = vmatprep.subr.mxu0 0.0
    %336 = vmatpush1.msra.mxu0 %v124
    %337 = vmatprep.subr.mxu0 0.0
    %338 = vmatpush1.msra.mxu0 %v125
    %339 = vmatprep.subr.mxu0 0.0
    %340 = vmatpush1.msra.mxu0 %v126
    %341 = vmatprep.subr.mxu0 0.0
    %342 = vmatpush1.msra.mxu0 %v127
    %343 = vmatprep.subr.mxu0 0.0
    %344 = vmatpush1.msra.mxu0 %v128
    %345 = vmatprep.subr.mxu0 0.0
    %346 = vmatpush1.msra.mxu0 %v129
    %347 = vmatprep.mubr.f32.mxu0 %v32
    %348 = vmatmul.mubr.f32.gmra.mrb[0].mxu0 %v31
    %v349 = vpop.f32.mrb[0].mxu0
    %v350 = vadd.f32 %v280, %v349
    %v351 = vpop.f32.mrb[0].mxu0
    %352 = vdwg.mxu0
    %353 = vmatprep.subr.mxu0 0.0
    %354 = vmatpush1.msra.mxu0 %v130
    %355 = vmatprep.subr.mxu0 0.0
    %356 = vmatpush1.msra.mxu0 %v131
    %357 = vmatprep.subr.mxu0 0.0
    %358 = vmatpush1.msra.mxu0 0.0
    %359 = vmatprep.subr.mxu0 0.0
    %360 = vmatpush1.msra.mxu0 0.0
    %361 = vmatprep.subr.mxu0 0.0
    %362 = vmatpush1.msra.mxu0 0.0
    %363 = vmatprep.subr.mxu0 0.0
    %364 = vmatpush1.msra.mxu0 0.0
    %365 = vmatprep.subr.mxu0 0.0
    %366 = vmatpush1.msra.mxu0 0.0
    %367 = vmatprep.subr.mxu0 0.0
    %368 = vmatpush1.msra.mxu0 0.0
    %369 = vmatprep.subr.mxu0 0.0
    %370 = vmatpush1.msra.mxu0 0.0
    %371 = vmatprep.subr.mxu0 0.0
    %372 = vmatpush1.msra.mxu0 0.0
    %373 = vmatprep.subr.mxu0 0.0
    %374 = vmatpush1.msra.mxu0 0.0
    %375 = vmatprep.subr.mxu0 0.0
    %376 = vmatpush1.msra.mxu0 0.0
    %377 = vmatprep.subr.mxu0 0.0
    %378 = vmatpush1.msra.mxu0 0.0
    %379 = vmatprep.subr.mxu0 0.0
    %380 = vmatpush1.msra.mxu0 0.0
    %381 = vmatprep.subr.mxu0 0.0
    %382 = vmatpush1.msra.mxu0 0.0
    %383 = vmatprep.subr.mxu0 0.0
    %384 = vmatpush1.msra.mxu0 0.0
    %385 = vmatprep.subr.mxu0 0.0
    %386 = vmatpush1.msra.mxu0 0.0
    %387 = vmatprep.subr.mxu0 0.0
    %388 = vmatpush1.msra.mxu0 0.0
    %389 = vmatprep.subr.mxu0 0.0
    %390 = vmatpush1.msra.mxu0 0.0
    %391 = vmatprep.subr.mxu0 0.0
    %392 = vmatpush1.msra.mxu0 0.0
    %393 = vmatprep.subr.mxu0 0.0
    %394 = vmatpush1.msra.mxu0 0.0
    %395 = vmatprep.subr.mxu0 0.0
    %396 = vmatpush1.msra.mxu0 0.0
    %397 = vmatprep.subr.mxu0 0.0
    %398 = vmatpush1.msra.mxu0 0.0
    %399 = vmatprep.subr.mxu0 0.0
    %400 = vmatpush1.msra.mxu0 0.0
    %401 = vmatprep.subr.mxu0 0.0
    %402 = vmatpush1.msra.mxu0 0.0
    %403 = vmatprep.subr.mxu0 0.0
    %404 = vmatpush1.msra.mxu0 0.0
    %405 = vmatprep.subr.mxu0 0.0
    %406 = vmatpush1.msra.mxu0 0.0
    %407 = vmatprep.subr.mxu0 0.0
    %408 = vmatpush1.msra.mxu0 0.0
    %409 = vmatprep.subr.mxu0 0.0
    %410 = vmatpush1.msra.mxu0 0.0
    %411 = vmatprep.subr.mxu0 0.0
    %412 = vmatpush1.msra.mxu0 0.0
    %413 = vmatprep.subr.mxu0 0.0
    %414 = vmatpush1.msra.mxu0 0.0
    %415 = vmatprep.subr.mxu0 0.0
    %416 = vmatpush1.msra.mxu0 0.0
    %417 = vmatprep.mubr.f32.mxu0 0.0
    %418 = vmatmul.mubr.f32.gmra.mrb[0].mxu0 %v141
    %v419 = vpop.f32.mrb[0].mxu0
    %v420 = vadd.f32 %v350, %v419
    %v421 = vpop.f32.mrb[0].mxu0
    %422 = vdwg.mxu0
    %v423 = vmax.f32 %v420, 0.0
    %v424 = vld [vmem:[%s3] sm:$0xff]
    %v425 = vld [vmem:[%s3 + $0x8] sm:$0xff]
    %v426 = vld [vmem:[%s3 + $0x10] sm:$0xff]
    %v427 = vld [vmem:[%s3 + $0x18] sm:$0xff]
    %v428 = vld [vmem:[%s3 + $0x20] sm:$0xff]
    %v429 = vld [vmem:[%s3 + $0x28] sm:$0xff]
    %v430 = vld [vmem:[%s3 + $0x30] sm:$0xff]
    %v431 = vld [vmem:[%s3 + $0x38] sm:$0xff]
    %v432 = vld [vmem:[%s3 + $0x40] sm:$0xff]
    %v433 = vld [vmem:[%s3 + $0x48] sm:$0xff]
    %v434 = vld [vmem:[%s3 + $0x50] sm:$0xff]
    %v435 = vld [vmem:[%s3 + $0x58] sm:$0xff]
    %v436 = vld [vmem:[%s3 + $0x60] sm:$0xff]
    %v437 = vld [vmem:[%s3 + $0x68] sm:$0xff]
    %v438 = vld [vmem:[%s3 + $0x70] sm:$0xff]
    %v439 = vld [vmem:[%s3 + $0x78] sm:$0xff]
    %v440 = vld [vmem:[%s4] sm:$0x1]
    %v442 = vlaneseq
    %v443 = vshrl.u32 %v442, 7
    %v444 = vsub.s32 0, %v443
    %v445 = vrot.slane %v440, %v444
    %447 = vmatprep.subr.mxu0 0.0
    %448 = vmatpush1.msra.mxu0 %v424
    %449 = vmatprep.subr.mxu0 0.0
    %450 = vmatpush1.msra.mxu0 %v425
    %451 = vmatprep.subr.mxu0 0.0
    %452 = vmatpush1.msra.mxu0 %v426
    %453 = vmatprep.subr.mxu0 0.0
    %454 = vmatpush1.msra.mxu0 %v427
    %455 = vmatprep.subr.mxu0 0.0
    %456 = vmatpush1.msra.mxu0 %v428
    %457 = vmatprep.subr.mxu0 0.0
    %458 = vmatpush1.msra.mxu0 %v429
    %459 = vmatprep.subr.mxu0 0.0
    %460 = vmatpush1.msra.mxu0 %v430
    %461 = vmatprep.subr.mxu0 0.0
    %462 = vmatpush1.msra.mxu0 %v431
    %463 = vmatprep.subr.mxu0 0.0
    %464 = vmatpush1.msra.mxu0 %v432
    %465 = vmatprep.subr.mxu0 0.0
    %466 = vmatpush1.msra.mxu0 %v433
    %467 = vmatprep.subr.mxu0 0.0
    %468 = vmatpush1.msra.mxu0 %v434
    %469 = vmatprep.subr.mxu0 0.0
    %470 = vmatpush1.msra.mxu0 %v435
    %471 = vmatprep.subr.mxu0 0.0
    %472 = vmatpush1.msra.mxu0 %v436
    %473 = vmatprep.subr.mxu0 0.0
    %474 = vmatpush1.msra.mxu0 %v437
    %475 = vmatprep.subr.mxu0 0.0
    %476 = vmatpush1.msra.mxu0 %v438
    %477 = vmatprep.subr.mxu0 0.0
    %478 = vmatpush1.msra.mxu0 %v439
    %479 = vmatprep.subr.mxu0 0.0
    %480 = vmatpush1.msra.mxu0 0.0
    %481 = vmatprep.subr.mxu0 0.0
    %482 = vmatpush1.msra.mxu0 0.0
    %483 = vmatprep.subr.mxu0 0.0
    %484 = vmatpush1.msra.mxu0 0.0
    %485 = vmatprep.subr.mxu0 0.0
    %486 = vmatpush1.msra.mxu0 0.0
    %487 = vmatprep.subr.mxu0 0.0
    %488 = vmatpush1.msra.mxu0 0.0
    %489 = vmatprep.subr.mxu0 0.0
    %490 = vmatpush1.msra.mxu0 0.0
    %491 = vmatprep.subr.mxu0 0.0
    %492 = vmatpush1.msra.mxu0 0.0
    %493 = vmatprep.subr.mxu0 0.0
    %494 = vmatpush1.msra.mxu0 0.0
    %495 = vmatprep.subr.mxu0 0.0
    %496 = vmatpush1.msra.mxu0 0.0
    %497 = vmatprep.subr.mxu0 0.0
    %498 = vmatpush1.msra.mxu0 0.0
    %499 = vmatprep.subr.mxu0 0.0
    %500 = vmatpush1.msra.mxu0 0.0
    %501 = vmatprep.subr.mxu0 0.0
    %502 = vmatpush1.msra.mxu0 0.0
    %503 = vmatprep.subr.mxu0 0.0
    %504 = vmatpush1.msra.mxu0 0.0
    %505 = vmatprep.subr.mxu0 0.0
    %506 = vmatpush1.msra.mxu0 0.0
    %507 = vmatprep.subr.mxu0 0.0
    %508 = vmatpush1.msra.mxu0 0.0
    %509 = vmatprep.subr.mxu0 0.0
    %510 = vmatpush1.msra.mxu0 0.0
    %511 = vmatprep.mubr.f32.mxu0 0.0
    %512 = vmatmul.mubr.f32.gmra.mrb[0].mxu0 %v423
    %v513 = vpop.f32.mrb[0].mxu0
    %v514 = vadd.f32 %v445, %v513
    %v515 = vpop.f32.mrb[0].mxu0
    %516 = vdwg.mxu0
    %v517 = vmax.f32 %v514, 0.0
    %v518 = vld [vmem:[%s5] sm:$0xff]
    %v519 = vld [vmem:[%s5 + $0x8] sm:$0xff]
    %v520 = vld [vmem:[%s5 + $0x10] sm:$0xff]
    %v521 = vld [vmem:[%s5 + $0x18] sm:$0xff]
    %v522 = vld [vmem:[%s5 + $0x20] sm:$0xff]
    %v523 = vld [vmem:[%s5 + $0x28] sm:$0xff]
    %v524 = vld [vmem:[%s5 + $0x30] sm:$0xff]
    %v525 = vld [vmem:[%s5 + $0x38] sm:$0xff]
    %v526 = vld [vmem:[%s6] sm:$0x1]
    %v528 = vlaneseq
    %v529 = vshrl.u32 %v528, 7
    %v530 = vsub.s32 0, %v529
    %v531 = vrot.slane %v526, %v530
    %vm533 = vcmask 523264
    %v535 = vsel %vm533, %v517, 0
    %537 = vmatprep.subr.mxu0 0.0
    %538 = vmatpush1.msra.mxu0 %v518
    %539 = vmatprep.subr.mxu0 0.0
    %540 = vmatpush1.msra.mxu0 %v519
    %541 = vmatprep.subr.mxu0 0.0
    %542 = vmatpush1.msra.mxu0 %v520
    %543 = vmatprep.subr.mxu0 0.0
    %544 = vmatpush1.msra.mxu0 %v521
    %545 = vmatprep.subr.mxu0 0.0
    %546 = vmatpush1.msra.mxu0 %v522
    %547 = vmatprep.subr.mxu0 0.0
    %548 = vmatpush1.msra.mxu0 %v523
    %549 = vmatprep.subr.mxu0 0.0
    %550 = vmatpush1.msra.mxu0 %v524
    %551 = vmatprep.subr.mxu0 0.0
    %552 = vmatpush1.msra.mxu0 %v525
    %553 = vmatprep.subr.mxu0 0.0
    %554 = vmatpush1.msra.mxu0 0.0
    %555 = vmatprep.subr.mxu0 0.0
    %556 = vmatpush1.msra.mxu0 0.0
    %557 = vmatprep.subr.mxu0 0.0
    %558 = vmatpush1.msra.mxu0 0.0
    %559 = vmatprep.subr.mxu0 0.0
    %560 = vmatpush1.msra.mxu0 0.0
    %561 = vmatprep.subr.mxu0 0.0
    %562 = vmatpush1.msra.mxu0 0.0
    %563 = vmatprep.subr.mxu0 0.0
    %564 = vmatpush1.msra.mxu0 0.0
    %565 = vmatprep.subr.mxu0 0.0
    %566 = vmatpush1.msra.mxu0 0.0
    %567 = vmatprep.subr.mxu0 0.0
    %568 = vmatpush1.msra.mxu0 0.0
    %569 = vmatprep.subr.mxu0 0.0
    %570 = vmatpush1.msra.mxu0 0.0
    %571 = vmatprep.subr.mxu0 0.0
    %572 = vmatpush1.msra.mxu0 0.0
    %573 = vmatprep.subr.mxu0 0.0
    %574 = vmatpush1.msra.mxu0 0.0
    %575 = vmatprep.subr.mxu0 0.0
    %576 = vmatpush1.msra.mxu0 0.0
    %577 = vmatprep.subr.mxu0 0.0
    %578 = vmatpush1.msra.mxu0 0.0
    %579 = vmatprep.subr.mxu0 0.0
    %580 = vmatpush1.msra.mxu0 0.0
    %581 = vmatprep.subr.mxu0 0.0
    %582 = vmatpush1.msra.mxu0 0.0
    %583 = vmatprep.subr.mxu0 0.0
    %584 = vmatpush1.msra.mxu0 0.0
    %585 = vmatprep.subr.mxu0 0.0
    %586 = vmatpush1.msra.mxu0 0.0
    %587 = vmatprep.subr.mxu0 0.0
    %588 = vmatpush1.msra.mxu0 0.0
    %589 = vmatprep.subr.mxu0 0.0
    %590 = vmatpush1.msra.mxu0 0.0
    %591 = vmatprep.subr.mxu0 0.0
    %592 = vmatpush1.msra.mxu0 0.0
    %593 = vmatprep.subr.mxu0 0.0
    %594 = vmatpush1.msra.mxu0 0.0
    %595 = vmatprep.subr.mxu0 0.0
    %596 = vmatpush1.msra.mxu0 0.0
    %597 = vmatprep.subr.mxu0 0.0
    %598 = vmatpush1.msra.mxu0 0.0
    %599 = vmatprep.subr.mxu0 0.0
    %600 = vmatpush1.msra.mxu0 0.0
    %601 = vmatprep.mubr.f32.mxu0 0.0
    %602 = vmatmul.mubr.f32.gmra.mrb[0].mxu0 %v535
    %v603 = vpop.f32.mrb[0].mxu0
    %v604 = vadd.f32 %v531, %v603
    %v605 = vpop.f32.mrb[0].mxu0
    %606 = vdwg.mxu0
    %vm607 = vcmask 80896
    %608 = vst.msk [vmem:[#allocation2] sm:$0xff] %vm607, %v604
    // Predicated region
    $region30: #{simple_nn_forward.1} parent=1 // pred_check
      _
    $region31: #{simple_nn_forward.1} parent=1 // pred_check_branch
      %610 = sbr.rel (0) target = $region33
    $region32: #{simple_nn_forward.1} parent=1 // pred_region
      %s612 = ssub.s32 128, 128
      %613 = vsyncadd [#allocation3], %s612
      %s615 = sshll.u32 [#allocation2], 4
      %s616 = int_to_ptr.vmem [resolvable:$true] %s615
      %618 = dma.vmem_to_hbm [thread:$0]  %s616, 128, %s7, [#allocation3]
    $region33: #{simple_nn_forward.1} parent=1 // pred_fallthru
      _
    // Predicated region
    $region34: #{simple_nn_forward.1} parent=1 // pred_check
      _
    $region35: #{simple_nn_forward.1} parent=1 // pred_check_branch
      %620 = sbr.rel (0) target = $region37
    $region36: #{simple_nn_forward.1} parent=1 // pred_region
      %621 = dma.done [#allocation3], 128
    $region37: #{simple_nn_forward.1} parent=1 // pred_fallthru
      _
    %622 = vsyncpa [#allocation3], 1

</llo_original>
